<compile_context>
chip_gen: v5e
topology: v5e:2x2
jax: 0.10.0
libtpu: 0.0.40
codegen_flags: <defaults>
</compile_context>

<pallas_src>
import jax
import jax.numpy as jnp
from jax.experimental import pallas as pl
from jax.experimental.pallas import tpu as pltpu


def _round_up(x, m):
    return ((x + m - 1) // m) * m


def _make_kernel(has_weights, use_scratch):
    """Build the kernel body for (weighted?, needs f32 scratch?) variants."""

    def kernel(*refs):
        if has_weights:
            if use_scratch:
                inv_ref, w_ref, seq_ref, out_ref, acc_ref = refs
            else:
                inv_ref, w_ref, seq_ref, out_ref = refs
                acc_ref = out_ref          # f32 output doubles as accumulator
        else:
            w_ref = None
            if use_scratch:
                inv_ref, seq_ref, out_ref, acc_ref = refs
            else:
                inv_ref, seq_ref, out_ref = refs
                acc_ref = out_ref

        j = pl.program_id(2)               # N (reduction) axis, last in grid

        @pl.when(j == 0)
        def _init():
            acc_ref[...] = jnp.zeros_like(acc_ref)

        seq = seq_ref[...]
        if has_weights:
            # Weights are already in seq dtype (cast hoisted to the wrapper).
            # VPU multiply + sublane reduce with f32 accumulation.
            contrib = jnp.sum(seq * w_ref[...][:, :, None], axis=1,
                              dtype=jnp.float32)
        else:
            contrib = jnp.sum(seq, axis=1, dtype=jnp.float32)
        acc_ref[...] = acc_ref[...] + contrib

        @pl.when(j == pl.num_programs(2) - 1)
        def _finalize():
            if use_scratch:
                out_ref[...] = (acc_ref[...] * inv_ref[0, 0]).astype(out_ref.dtype)
            else:
                out_ref[...] = out_ref[...] * inv_ref[0, 0]

    return kernel


_SEQ_BLOCK_CAP = 8 * 1024 * 1024  # target per-step seq block size (bytes)


def avg_readout(seq, msk=None, *, block_b=None, block_n=None):
    """Pallas TPU implementation of AvgReadout.forward(seq, msk)."""
    B, N, D = seq.shape
    out_dtype = seq.dtype
    itemsize = seq.dtype.itemsize
    has_weights = msk is not None

    if has_weights:
        # Cast once in the wrapper (exact for 0/1 masks); global denominator
        # over the WHOLE mask, matching torch.sum(msk). All-zero mask yields
        # inf/nan, same as the PyTorch reference.
        weights = msk.astype(seq.dtype)
        inv = jnp.reshape(1.0 / jnp.sum(msk.astype(jnp.float32)),
                          (1, 1)).astype(jnp.float32)
    else:
        weights = None
        inv = jnp.full((1, 1), 1.0 / N, dtype=jnp.float32)

    # ---- batch tile -------------------------------------------------------
    if block_b is not None:
        bt = int(block_b)
        if bt <= 0:
            raise ValueError("block_b must be positive")
        if bt >= B:
            bt = B
        elif bt % 8 != 0:
            raise ValueError("block_b must be a multiple of 8 when < batch size")
    else:
        if B <= 8:
            bt = B
        elif B % 8 == 0:
            bt = 8
        elif B <= 64:
            bt = B                     # single full-B block, no padded rows
        else:
            bt = 8                     # pad B (<= 7 wasted rows)
    Bp = _round_up(B, bt)

    # ---- D split (v7x: keep >=2 steps on a parallel axis; also VMEM guard) -
    d_splits = 1
    if (Bp // bt) < 2 and D >= 512 and D % 256 == 0:
        d_splits = 2
    while (bt * 128 * (D // d_splits) * itemsize > _SEQ_BLOCK_CAP
           and D % (d_splits * 2) == 0
           and (D // (d_splits * 2)) % 128 == 0):
        d_splits *= 2
    dt = D // d_splits

    # ---- N tile ------------------------------------------------------------
    if block_n is not None:
        nt = int(block_n)
        if nt <= 0:
            raise ValueError("block_n must be positive")
        if nt >= N:
            nt = N
        elif nt % 128 != 0:
            raise ValueError("block_n must be a multiple of 128 when < seq length")
    else:
        if N <= 128:
            nt = N
        else:
            cands = [c for c in (4096, 2048, 1024, 512, 256, 128)
                     if bt * c * dt * itemsize <= _SEQ_BLOCK_CAP]
            if not cands:
                cands = [128]
            # Minimize padded length (HBM traffic), then prefer fewer steps.
            nt = min(cands, key=lambda c: (_round_up(N, c), -c))
    Np = _round_up(N, nt)

    # ---- tail handling via zero padding (exact for both paths) -------------
    pad_b, pad_n = Bp - B, Np - N
    if pad_b or pad_n:
        seq = jnp.pad(seq, ((0, pad_b), (0, pad_n), (0, 0)))
        if has_weights:
            weights = jnp.pad(weights, ((0, pad_b), (0, pad_n)))

    use_scratch = jnp.dtype(out_dtype) != jnp.dtype(jnp.float32)

    # ---- specs / grid -------------------------------------------------------
    in_specs = [pl.BlockSpec(memory_space=pltpu.SMEM)]        # 1/denominator
    args = [inv]
    if has_weights:
        in_specs.append(pl.BlockSpec((bt, nt), lambda i, k, j: (i, j)))
        args.append(weights)
    in_specs.append(pl.BlockSpec((bt, nt, dt), lambda i, k, j: (i, j, k)))
    args.append(seq)

    out_spec = pl.BlockSpec((bt, dt), lambda i, k, j: (i, k))
    scratch = [pltpu.VMEM((bt, dt), jnp.float32)] if use_scratch else []
    grid = (Bp // bt, d_splits, Np // nt)

    # ---- VMEM budget (double-buffered inputs + f32 product temp + out/acc) -
    seq_blk = bt * nt * dt * itemsize
    w_blk = bt * nt * itemsize if has_weights else 0
    tmp_blk = bt * nt * dt * 4
    out_blk = bt * dt * jnp.dtype(out_dtype).itemsize
    vmem_needed = 2 * (seq_blk + w_blk) + tmp_blk + 2 * out_blk + bt * dt * 4
    vmem_limit = int(min(max(vmem_needed + (4 << 20), 24 << 20), 48 << 20))

    bytes_accessed = (Bp * Np * D * itemsize
                      + (Bp * Np * itemsize if has_weights else 0)
                      + B * D * jnp.dtype(out_dtype).itemsize)
    cost = pl.CostEstimate(flops=int(2 * B * N * D), transcendentals=0,
                           bytes_accessed=int(bytes_accessed))

    out = pl.pallas_call(
        _make_kernel(has_weights, use_scratch),
        out_shape=jax.ShapeDtypeStruct((Bp, D), out_dtype),
        grid=grid,
        in_specs=in_specs,
        out_specs=out_spec,
        scratch_shapes=scratch,
        compiler_params=pltpu.CompilerParams(
            dimension_semantics=("parallel", "parallel", "arbitrary"),
            vmem_limit_bytes=vmem_limit),
        cost_estimate=cost,
    )(*args)

    if pad_b:
        out = out[:B]
    return out


if __name__ == "__main__":
    key = jax.random.PRNGKey(0)
    k1, k2, k3, k4, k5, k6 = jax.random.split(key, 6)

    # Small shapes matching the module's forward: seq (B, N, D), msk (B, N).
    B, N, D = 2, 8, 32
    seq = jax.random.normal(k1, (B, N, D), dtype=jnp.float32)
    msk = (jax.random.uniform(k2, (B, N)) > 0.3).astype(jnp.float32)

    # Masked path
    out_masked = avg_readout(seq, msk)
    jax.block_until_ready(out_masked)
    ref_masked = jnp.sum(seq * msk[:, :, None], axis=1) / jnp.sum(msk)
    assert out_masked.shape == (B, D)
    assert jnp.allclose(out_masked, ref_masked, atol=1e-4, rtol=1e-4)

    # No-mask (mean) path — no ones-weights stream.
    out_mean = avg_readout(seq, None)
    jax.block_until_ready(out_mean)
    ref_mean = jnp.mean(seq, axis=1)
    assert out_mean.shape == (B, D)
    assert jnp.allclose(out_mean, ref_mean, atol=1e-4, rtol=1e-4)

    # Tiled path: multi-step N reduction into the resident accumulator, B tiled.
    B2, N2, D2 = 16, 256, 128
    seq2 = jax.random.normal(k3, (B2, N2, D2), dtype=jnp.float32)
    msk2 = (jax.random.uniform(k4, (B2, N2)) > 0.5).astype(jnp.float32)
    out2 = avg_readout(seq2, msk2, block_b=8, block_n=128)
    jax.block_until_ready(out2)
    ref2 = jnp.sum(seq2 * msk2[:, :, None], axis=1) / jnp.sum(msk2)
    assert out2.shape == (B2, D2)
    assert jnp.allclose(out2, ref2, atol=1e-4, rtol=1e-4)

    # Tail/padding path: N not a multiple of the auto tile (zero-pad handling).
    B3, N3, D3 = 3, 130, 32
    seq3 = jax.random.normal(k5, (B3, N3, D3), dtype=jnp.float32)
    msk3 = (jax.random.uniform(k6, (B3, N3)) > 0.4).astype(jnp.float32)
    out3 = avg_readout(seq3, msk3)
    jax.block_until_ready(out3)
    ref3 = jnp.sum(seq3 * msk3[:, :, None], axis=1) / jnp.sum(msk3)
    assert out3.shape == (B3, D3)
    assert jnp.allclose(out3, ref3, atol=1e-4, rtol=1e-4)

    out3m = avg_readout(seq3, None)
    jax.block_until_ready(out3m)
    assert jnp.allclose(out3m, jnp.mean(seq3, axis=1), atol=1e-4, rtol=1e-4)

    # bf16 path (exercises the f32 scratch accumulator variant).
    seq_bf = seq.astype(jnp.bfloat16)
    out_bf = avg_readout(seq_bf, msk)
    jax.block_until_ready(out_bf)
    ref_bf = (jnp.sum(seq_bf.astype(jnp.float32) * msk[:, :, None], axis=1)
              / jnp.sum(msk))
    assert out_bf.dtype == jnp.bfloat16
    assert jnp.allclose(out_bf.astype(jnp.float32), ref_bf, atol=1e-1, rtol=1e-1)

    print("KERNEL_OK")
</pallas_src>

<mosaic_0001>
module attributes {stable_mosaic.version = 11 : i64} {
  func.func @kernel(%arg0: i32, %arg1: i32, %arg2: i32, %arg3: memref<1x1xf32, #tpu.memory_space<smem>>, %arg4: memref<2x8xf32, #tpu.memory_space<vmem>>, %arg5: memref<2x8x32xf32, #tpu.memory_space<vmem>>, %arg6: memref<2x32xf32, #tpu.memory_space<vmem>>) attributes {dimension_semantics = [#tpu.dimension_semantics<parallel>, #tpu.dimension_semantics<parallel>, #tpu.dimension_semantics<arbitrary>], iteration_bounds = array<i64: 1, 1, 1>, scalar_prefetch = 0 : i64, scratch_operands = 0 : i64, tpu.core_type = #tpu.core_type<tc>, window_params = [{transform_indices = @transform_0, window_bounds = array<i64: 1, 1>}, {transform_indices = @transform_1, window_bounds = array<i64: 2, 8>}, {transform_indices = @transform_2, window_bounds = array<i64: 2, 8, 32>}, {transform_indices = @transform_3, window_bounds = array<i64: 2, 32>}]} {
    %c0_i32 = arith.constant 0 : i32
    %0 = arith.cmpi eq, %arg2, %c0_i32 : i32
    %1 = arith.extui %0 : i1 to i32
    %c0_i32_0 = arith.constant 0 : i32
    %2 = arith.cmpi ne, %1, %c0_i32_0 : i32
    scf.if %2 {
      %cst_11 = arith.constant 0.000000e+00 : f32
      %15 = vector.broadcast %cst_11 : f32 to vector<2x32xf32>
      %c0_12 = arith.constant 0 : index
      %c0_13 = arith.constant 0 : index
      %16 = vector.load %arg6[%c0_12, %c0_13] : memref<2x32xf32, #tpu.memory_space<vmem>>, vector<2x32xf32>
      tpu.vector_store %arg6[%c0_12, %c0_13], %15 {strides = array<i32>} : memref<2x32xf32, #tpu.memory_space<vmem>>, vector<2x32xf32>,
    } else {
    }
    %c0 = arith.constant 0 : index
    %c0_1 = arith.constant 0 : index
    %c0_2 = arith.constant 0 : index
    %3 = vector.load %arg5[%c0, %c0_1, %c0_2] : memref<2x8x32xf32, #tpu.memory_space<vmem>>, vector<2x8x32xf32>
    %c0_3 = arith.constant 0 : index
    %c0_4 = arith.constant 0 : index
    %4 = vector.load %arg4[%c0_3, %c0_4] : memref<2x8xf32, #tpu.memory_space<vmem>>, vector<2x8xf32>
    %5 = vector.shape_cast %4 : vector<2x8xf32> to vector<2x8x1xf32>
    %6 = vector.broadcast %5 : vector<2x8x1xf32> to vector<2x8x32xf32>
    %7 = arith.mulf %3, %6 : vector<2x8x32xf32>
    %cst = arith.constant dense<0.000000e+00> : vector<2x32xf32>
    %8 = vector.multi_reduction <add>, %7, %cst [1] : vector<2x8x32xf32> to vector<2x32xf32>
    %c0_5 = arith.constant 0 : index
    %c0_6 = arith.constant 0 : index
    %9 = vector.load %arg6[%c0_5, %c0_6] : memref<2x32xf32, #tpu.memory_space<vmem>>, vector<2x32xf32>
    %10 = arith.addf %9, %8 : vector<2x32xf32>
    %c0_7 = arith.constant 0 : index
    %c0_8 = arith.constant 0 : index
    %11 = vector.load %arg6[%c0_7, %c0_8] : memref<2x32xf32, #tpu.memory_space<vmem>>, vector<2x32xf32>
    tpu.vector_store %arg6[%c0_7, %c0_8], %10 {strides = array<i32>} : memref<2x32xf32, #tpu.memory_space<vmem>>, vector<2x32xf32>,
    %c0_i32_9 = arith.constant 0 : i32
    %12 = arith.cmpi eq, %arg2, %c0_i32_9 : i32
    %13 = arith.extui %12 : i1 to i32
    %c0_i32_10 = arith.constant 0 : i32
    %14 = arith.cmpi ne, %13, %c0_i32_10 : i32
    scf.if %14 {
      %c0_11 = arith.constant 0 : index
      %c0_12 = arith.constant 0 : index
      %15 = vector.load %arg6[%c0_11, %c0_12] : memref<2x32xf32, #tpu.memory_space<vmem>>, vector<2x32xf32>
      %c0_13 = arith.constant 0 : index
      %c0_14 = arith.constant 0 : index
      %16 = memref.load %arg3[%c0_13, %c0_14] : memref<1x1xf32, #tpu.memory_space<smem>>
      %17 = vector.broadcast %16 : f32 to vector<2x32xf32>
      %18 = arith.mulf %15, %17 : vector<2x32xf32>
      %c0_15 = arith.constant 0 : index
      %c0_16 = arith.constant 0 : index
      %19 = vector.load %arg6[%c0_15, %c0_16] : memref<2x32xf32, #tpu.memory_space<vmem>>, vector<2x32xf32>
      tpu.vector_store %arg6[%c0_15, %c0_16], %18 {strides = array<i32>} : memref<2x32xf32, #tpu.memory_space<vmem>>, vector<2x32xf32>,
    } else {
    }
    return
  }
  func.func @transform_0(%arg0: i32, %arg1: i32, %arg2: i32) -> (i32, i32) {
    %c0_i32 = arith.constant 0 : i32
    %c0_i32_0 = arith.constant 0 : i32
    %c0_i32_1 = arith.constant 0 : i32
    return %c0_i32, %c0_i32_0 : i32, i32
  }
  func.func @transform_1(%arg0: i32, %arg1: i32, %arg2: i32) -> (i32, i32) {
    %c0_i32 = arith.constant 0 : i32
    return %arg0, %arg2 : i32, i32
  }
  func.func @transform_2(%arg0: i32, %arg1: i32, %arg2: i32) -> (i32, i32, i32) {
    %c0_i32 = arith.constant 0 : i32
    return %arg0, %arg2, %arg1 : i32, i32, i32
  }
  func.func @transform_3(%arg0: i32, %arg1: i32, %arg2: i32) -> (i32, i32) {
    %c0_i32 = arith.constant 0 : i32
    return %arg0, %arg1 : i32, i32
  }
}

</mosaic_0001>

<llo_original>
// kernel: tpu_custom_call.1
$region0: #{tpu_custom_call.1}
  #allocation0 [shape = 'u32[]', space=smem, size = 0x4, offset = 0x4, fixed_abs, tag = 'smem constant byte address 0x4 - core index']
  #allocation1 [shape = 'u32[72,128]{1,0:T(1,128)}', space=vmem, size = 0x9000, scoped, tag = 'internal scratch']
  #allocation2 [shape = 'f32[1,1]{1,0:T(1,128)S(6)}', space=smem, size = 0x200, scoped, tag = 'scoped memory for tpu_custom_call.1']
  %s0 = inlined_call_operand.<no memory space> [shape: f32[1,1], index: 0, kind: input, shape index: {}]
  %s1 = inlined_call_operand.vmem [shape: f32[2,8], index: 1, kind: input, shape index: {}]
  %s2 = inlined_call_operand.hbm [shape: f32[2,8,32], index: 2, kind: input, shape index: {}]
  %s3 = inlined_call_operand.hbm [shape: f32[2,32], index: 3, kind: output, shape index: {}]
  %s4 = sld [smem:[#allocation0]]
  $region34: #{tpu_custom_call.1} parent=0
    _
  %s6 = ssub.s32 1, %s4
  %s7 = scalar_select 0, %s6, %s4
  %8 = sst [smem:[#allocation2]] %s0
  $region1: #{tpu_custom_call.1} parent=0
    #allocation3 [shape = 'u8[8192]{0}', space=vmem, size = 0x2000, scoped, tag = 'input window, operand 2, single buffered']
    #allocation4 [shape = 's32[1]{0}', space=sflag, size = 0x4, scoped, tag = 'scoped memory for tpu_custom_call.1']
    #allocation5 [shape = 's32[1]{0}', space=sflag, size = 0x4, scoped, tag = 'scoped memory for tpu_custom_call.1']
    #allocation6 [shape = 'u8[1024]{0}', space=vmem, size = 0x400, scoped, tag = 'output window, operand 0, single buffered']
    %9 = vsyncpa [#allocation4], 0
    %10 = vsyncpa [#allocation5], 0
    // Predicated region
    $region2: #{tpu_custom_call.1} parent=1 // pred_check
      _
    $region3: #{tpu_custom_call.1} parent=1 // pred_check_branch
      %12 = sbr.rel (0) target = $region5
    $region4: #{tpu_custom_call.1} parent=1 // pred_region
      _
    $region5: #{tpu_custom_call.1} parent=1 // pred_fallthru
      _
    // Predicated region
    $region6: #{tpu_custom_call.1} parent=1 // pred_check
      _
    $region7: #{tpu_custom_call.1} parent=1 // pred_check_branch
      %14 = sbr.rel (0) target = $region9
    $region8: #{tpu_custom_call.1} parent=1 // pred_region
      _
    $region9: #{tpu_custom_call.1} parent=1 // pred_fallthru
      _
    // Predicated region
    $region10: #{tpu_custom_call.1} parent=1 // pred_check
      _
    $region11: #{tpu_custom_call.1} parent=1 // pred_check_branch
      %16 = sbr.rel (0) target = $region13
    $region12: #{tpu_custom_call.1} parent=1 // pred_region
      %18 = vsyncadd [#allocation4], 0
      %s19 = sshll.u32 %s2, 4
      %s20 = int_to_ptr.hbm [resolvable:$true] %s19
      %s21 = sshll.u32 [#allocation3], 4
      %s22 = int_to_ptr.vmem [resolvable:$true] %s21
      %27 = dma.hbm_to_vmem [thread:$0]  %s20, 256, %s22, [#allocation4], 128, 128, 8
    $region13: #{tpu_custom_call.1} parent=1 // pred_fallthru
      _
    // Predicated region
    $region14: #{tpu_custom_call.1} parent=1 // pred_check
      _
    $region15: #{tpu_custom_call.1} parent=1 // pred_check_branch
      %29 = sbr.rel (0) target = $region17
    $region16: #{tpu_custom_call.1} parent=1 // pred_region
      %31 = dma.done [#allocation4], 256
    $region17: #{tpu_custom_call.1} parent=1 // pred_fallthru
      _
    %p32 = scmp.eq.s32.totalorder 0, 0
    // Predicated region
    $region18: #{tpu_custom_call.1} parent=1 // pred_check
      %p33 = pneg %p32
    $region19: #{tpu_custom_call.1} parent=1 // pred_check_branch
      %35 = sbr.rel (%p33) target = $region21
    $region20: #{tpu_custom_call.1} parent=1 // pred_region
      %vm36 = vcmask 254976
      %37 = vst.msk [vmem:[#allocation6] sm:$0x3] %vm36, 0.0
    $region21: #{tpu_custom_call.1} parent=1 // pred_fallthru
      _
    %v38 = vld [vmem:[#allocation3] sm:$0xff]
    %v39 = vld [vmem:[#allocation3 + $0x8] sm:$0xff]
    %v40 = vld [vmem:[%s1] sm:$0x3]
    %v41 = vperm.slane %v40, 0
    %v42 = vlaneseq
    %v43 = vshrl.u32 %v42, 7
    %45 = vset.pattern.permute.xlu0 %v43
    %46 = vperm.xlu0 %45, %v41
    %v47 = vpop.permute.xlu0 %46
    %v48 = vperm.slane %v40, 1
    %v49 = vlaneseq
    %v50 = vshrl.u32 %v49, 7
    %52 = vset.pattern.permute.xlu0 %v50
    %53 = vperm.xlu0 %52, %v48
    %v54 = vpop.permute.xlu0 %53
    %v55 = vmul.f32 %v38, %v47
    %v56 = vmul.f32 %v39, %v54
    %vm57 = vcmask 261120
    %v58 = vsel %vm57, %v55, 0.0
    %v59 = vrot.slane %v58, 4
    %v60 = vadd.f32 %v58, %v59
    %v61 = vrot.slane %v60, 2
    %v62 = vadd.f32 %v60, %v61
    %v63 = vrot.slane %v62, 1
    %v64 = vadd.f32 %v62, %v63
    %v65 = vsel %vm57, %v56, 0.0
    %v66 = vrot.slane %v65, 4
    %v67 = vadd.f32 %v65, %v66
    %v68 = vrot.slane %v67, 2
    %v69 = vadd.f32 %v67, %v68
    %v70 = vrot.slane %v69, 1
    %v71 = vadd.f32 %v69, %v70
    %v72 = vld [vmem:[#allocation6] sm:$0x3]
    %vm75 = vcmask 1041409
    %v76 = vsel %vm75, %v71, %v64
    %v78 = vadd.f32 %v72, %v76
    %vm79 = vcmask 254976
    %80 = vst.msk [vmem:[#allocation6] sm:$0x3] %vm79, %v78
    // Predicated region
    $region22: #{tpu_custom_call.1} parent=1 // pred_check
      %p81 = pneg %p32
    $region23: #{tpu_custom_call.1} parent=1 // pred_check_branch
      %83 = sbr.rel (%p81) target = $region25
    $region24: #{tpu_custom_call.1} parent=1 // pred_region
      %v84 = vld [vmem:[#allocation6] sm:$0x3]
      %s85 = sld [smem:[#allocation2]]
      %v86 = vstv %s85
      %v87 = vmul.f32 %v84, %v86
      %88 = vst.msk [vmem:[#allocation6] sm:$0x3] %vm79, %v87
    $region25: #{tpu_custom_call.1} parent=1 // pred_fallthru
      _
    // Predicated region
    $region26: #{tpu_custom_call.1} parent=1 // pred_check
      _
    $region27: #{tpu_custom_call.1} parent=1 // pred_check_branch
      %90 = sbr.rel (0) target = $region29
    $region28: #{tpu_custom_call.1} parent=1 // pred_region
      %92 = vsyncadd [#allocation5], 0
      %s94 = sshll.u32 [#allocation6], 4
      %s95 = int_to_ptr.vmem [resolvable:$true] %s94
      %s96 = sshll.u32 %s3, 4
      %s97 = int_to_ptr.hbm [resolvable:$true] %s96
      %99 = dma.vmem_to_hbm [thread:$0]  %s95, 32, %s97, [#allocation5]
    $region29: #{tpu_custom_call.1} parent=1 // pred_fallthru
      _
    // Predicated region
    $region30: #{tpu_custom_call.1} parent=1 // pred_check
      _
    $region31: #{tpu_custom_call.1} parent=1 // pred_check_branch
      %101 = sbr.rel (0) target = $region33
    $region32: #{tpu_custom_call.1} parent=1 // pred_region
      %103 = dma.done [#allocation5], 32
    $region33: #{tpu_custom_call.1} parent=1 // pred_fallthru
      _
    %104 = vsyncpa [#allocation4], 1
    %105 = vsyncpa [#allocation5], 1

</llo_original>
